<compile_context>
chip_gen: v6e
topology: v6e:2x2x1
jax: 0.10.0
libtpu: 0.0.40
codegen_flags: <defaults>
</compile_context>

<pallas_src>
import math

import jax
import jax.numpy as jnp
from jax.experimental import pallas as pl
from jax.experimental.pallas import tpu as pltpu


# ---------------------------------------------------------------------------
# Kernels
# ---------------------------------------------------------------------------

def _lora_kernel_k_resident(x_ref, wbase_ref, bbase_ref, inter_ref, wb_ref,
                            o_ref):
    """Full-K base matmul + LoRA-B matmul + bias in one shot (2-D grid)."""
    base = jnp.dot(x_ref[...], wbase_ref[...],
                   preferred_element_type=jnp.float32)            # (tm, tn)
    lora = jnp.dot(inter_ref[...], wb_ref[...],
                   preferred_element_type=jnp.float32)            # (tm, tn)
    o_ref[...] = (base + bbase_ref[...] + lora).astype(o_ref.dtype)


def _lora_kernel_k_tiled(x_ref, wbase_ref, bbase_ref, inter_ref, wb_ref,
                         o_ref, acc_ref):
    """K-tiled base matmul with f32 accumulator; LoRA + bias applied at last k."""
    k = pl.program_id(2)

    @pl.when(k == 0)
    def _init():
        acc_ref[...] = jnp.zeros_like(acc_ref)

    acc_ref[...] += jnp.dot(x_ref[...], wbase_ref[...],
                            preferred_element_type=jnp.float32)

    @pl.when(k == pl.num_programs(2) - 1)
    def _finalize():
        lora = jnp.dot(inter_ref[...], wb_ref[...],
                       preferred_element_type=jnp.float32)
        o_ref[...] = (acc_ref[...] + bbase_ref[...] + lora).astype(o_ref.dtype)


# ---------------------------------------------------------------------------
# Tiling helpers
# ---------------------------------------------------------------------------

def _round_up(x, m):
    return ((x + m - 1) // m) * m


def _largest_divisor_tile(dim, pref, align):
    """Largest multiple of `align` <= pref that divides dim; None if none."""
    if dim % align:
        return None
    t = min((pref // align) * align, dim)
    while t >= align:
        if dim % t == 0:
            return t
        t -= align
    return None


def _tile_and_pad(dim, pref):
    """(tile, padded_dim) for a lane-major dimension.

    Prefers 256-aligned tiles (v6e/v7x MXU), then 128; if nothing divides,
    pads the dimension to a tile multiple instead of using a full-dim block.
    """
    if dim <= pref:
        return dim, dim
    for align in (256, 128):
        t = _largest_divisor_tile(dim, pref, align)
        if t is not None:
            return t, dim
    t = max(128, (pref // 128) * 128)
    return t, _round_up(dim, t)


def _vmem_block_bytes(tm, tn, tk, x_it, w_it, out_it, rank, w_buf, k_resident):
    b = 2 * tm * tk * x_it             # x block (double-buffered)
    b += w_buf * tk * tn * w_it        # streamed base-weight block
    b += 2 * tn * 4                    # bias block (f32)
    b += 2 * tm * rank * 4             # x @ A intermediate block (f32)
    b += 2 * rank * tn * 4             # lora_B block (f32)
    b += 2 * tm * tn * out_it          # output block
    if not k_resident:
        b += tm * tn * 4               # f32 accumulator scratch
    return b


def _wbase_block_spec(block_shape, index_map, deep):
    if deep:
        try:
            return pl.BlockSpec(block_shape, index_map,
                                pipeline_mode=pl.Buffered(3))
        except TypeError:  # pipeline_mode not available in this jax version
            pass
    return pl.BlockSpec(block_shape, index_map)


# ---------------------------------------------------------------------------
# Forward wrapper
# ---------------------------------------------------------------------------

def lora_linear4bit_forward(x, w_base, b_base, w_a, w_b, scaling, *,
                            tm=512, tn=512, tk=4096, vmem_budget_bytes=None):
    """out = x @ w_base + b_base + scaling * ((x @ w_a) @ w_b)

    x:      [..., K]
    w_base: [K, N]   (transposed PyTorch base weight)
    b_base: [N] or [1, N]
    w_a:    [K, R]   (transposed lora_A weight)
    w_b:    [R, N]   (transposed lora_B weight)
    """
    orig_shape = x.shape
    K = orig_shape[-1]
    x2 = x.reshape(-1, K)
    M = x2.shape[0]
    N = w_base.shape[1]
    R = w_a.shape[1]
    out_dtype = x2.dtype

    # LoRA down-projection hoisted out of the kernel: tiny [M, R] matmul in
    # plain XLA with f32 accumulation; scaling folded in here (no in-kernel
    # multiply / extra low-precision round-trip).
    inter = jnp.dot(x2, w_a.astype(x2.dtype),
                    preferred_element_type=jnp.float32) * jnp.float32(scaling)

    b2 = jnp.asarray(b_base, jnp.float32).reshape(1, N)
    wbf = w_b.astype(jnp.float32)

    x_it = x2.dtype.itemsize
    w_it = w_base.dtype.itemsize
    out_it = jnp.dtype(out_dtype).itemsize

    # ---- per-generation VMEM budget ---------------------------------------
    if vmem_budget_bytes is None:
        try:
            vmem_cap = int(pltpu.get_tpu_info().vmem_capacity_bytes)
        except Exception:
            vmem_cap = 64 * 1024 * 1024      # conservative (v7x per-TC VMEM)
        vmem_budget_bytes = min(vmem_cap // 2, 48 * 1024 * 1024)
    vmem_budget_bytes = int(vmem_budget_bytes)
    vmem_limit = int(min(max(vmem_budget_bytes * 5 // 4, 32 * 1024 * 1024),
                         56 * 1024 * 1024))

    # ---- tile selection -----------------------------------------------------
    pack = max(8, 32 // x_it)       # sublane packing: 8 f32 / 16 bf16 / 32 int8
    tm_eff = min(tm, _round_up(M, pack))
    tm_eff = max(pack, (tm_eff // pack) * pack)

    tn_eff, Np = _tile_and_pad(N, tn)

    w_buf = 3 if tm_eff <= 32 else 2    # deeper W pipelining for decode shapes

    def fits(tm_, tn_, tk_, k_res):
        return _vmem_block_bytes(tm_, tn_, tk_, x_it, w_it, out_it, R,
                                 w_buf, k_res) <= vmem_budget_bytes

    if fits(tm_eff, tn_eff, K, True):
        # Whole reduction dim resident: no accumulator, no pl.when phases.
        k_resident, tk_eff, Kp = True, K, K
    else:
        k_resident = False
        tk_pref = max(128, min(tk, K))
        tk_eff, Kp = _tile_and_pad(K, tk_pref)
        while not fits(tm_eff, tn_eff, tk_eff, False) and tk_eff > 128:
            tk_pref = max(128, tk_pref // 2)
            tk_eff, Kp = _tile_and_pad(K, tk_pref)
        while not fits(tm_eff, tn_eff, tk_eff, False) and tn_eff > 256:
            tn_eff, Np = _tile_and_pad(N, max(256, tn_eff // 2))
        while not fits(tm_eff, tn_eff, tk_eff, False) and tm_eff > pack:
            tm_eff = max(pack, _round_up(tm_eff // 2, pack))

    Mp = _round_up(M, tm_eff)

    # ---- padding (keeps every block tile-sized; no full-dim fallbacks) -----
    if Mp != M:
        x2 = jnp.pad(x2, ((0, Mp - M), (0, 0)))
        inter = jnp.pad(inter, ((0, Mp - M), (0, 0)))
    if Kp != K:
        x2 = jnp.pad(x2, ((0, 0), (0, Kp - K)))
        w_base = jnp.pad(w_base, ((0, Kp - K), (0, 0)))
    if Np != N:
        w_base = jnp.pad(w_base, ((0, 0), (0, Np - N)))
        b2 = jnp.pad(b2, ((0, 0), (0, Np - N)))
        wbf = jnp.pad(wbf, ((0, 0), (0, Np - N)))

    n_w_blocks = (Np // tn_eff) * (1 if k_resident else Kp // tk_eff)
    deep = (tm_eff <= 32) and (n_w_blocks >= 3)

    flops = 2 * Mp * Kp * Np + 2 * Mp * R * Np
    bytes_accessed = (x2.size * x_it + w_base.size * w_it + b2.size * 4
                      + inter.size * 4 + wbf.size * 4 + Mp * Np * out_it)
    cost = pl.CostEstimate(flops=int(flops), transcendentals=0,
                           bytes_accessed=int(bytes_accessed))

    if k_resident:
        grid = (Mp // tm_eff, Np // tn_eff)
        in_specs = [
            pl.BlockSpec((tm_eff, Kp), lambda i, j: (i, 0)),            # x
            _wbase_block_spec((Kp, tn_eff), lambda i, j: (0, j), deep),  # W base
            pl.BlockSpec((1, tn_eff), lambda i, j: (0, j)),              # bias
            pl.BlockSpec((tm_eff, R), lambda i, j: (i, 0)),              # x @ A
            pl.BlockSpec((R, tn_eff), lambda i, j: (0, j)),              # lora_B
        ]
        out_specs = pl.BlockSpec((tm_eff, tn_eff), lambda i, j: (i, j))
        scratch_shapes = []
        kernel = _lora_kernel_k_resident
        dims = ("parallel", "parallel")
    else:
        grid = (Mp // tm_eff, Np // tn_eff, Kp // tk_eff)
        in_specs = [
            pl.BlockSpec((tm_eff, tk_eff), lambda i, j, k: (i, k)),          # x
            _wbase_block_spec((tk_eff, tn_eff), lambda i, j, k: (k, j), deep),
            pl.BlockSpec((1, tn_eff), lambda i, j, k: (0, j)),               # bias
            pl.BlockSpec((tm_eff, R), lambda i, j, k: (i, 0)),               # x @ A
            pl.BlockSpec((R, tn_eff), lambda i, j, k: (0, j)),               # lora_B
        ]
        out_specs = pl.BlockSpec((tm_eff, tn_eff), lambda i, j, k: (i, j))
        scratch_shapes = [pltpu.VMEM((tm_eff, tn_eff), jnp.float32)]
        kernel = _lora_kernel_k_tiled
        dims = ("parallel", "parallel", "arbitrary")

    out = pl.pallas_call(
        kernel,
        out_shape=jax.ShapeDtypeStruct((Mp, Np), out_dtype),
        grid_spec=pltpu.PrefetchScalarGridSpec(
            num_scalar_prefetch=0,
            grid=grid,
            in_specs=in_specs,
            out_specs=out_specs,
            scratch_shapes=scratch_shapes,
        ),
        compiler_params=pltpu.CompilerParams(
            dimension_semantics=dims,
            vmem_limit_bytes=vmem_limit,
        ),
        cost_estimate=cost,
    )(x2, w_base, b2, inter, wbf)

    if Mp != M or Np != N:
        out = out[:M, :N]
    return out.reshape(*orig_shape[:-1], N)


def kaiming_uniform(key, shape, a=math.sqrt(5)):
    # Matches nn.init.kaiming_uniform_(w, a=sqrt(5)) for weight [out, in].
    fan_in = shape[1]
    gain = math.sqrt(2.0 / (1.0 + a * a))
    bound = gain * math.sqrt(3.0 / fan_in)
    return jax.random.uniform(key, shape, jnp.float32, minval=-bound, maxval=bound)


if __name__ == "__main__":
    # ---- Test 1: module-faithful init (lora_B == 0), f32, tiny shapes ------
    batch, seq = 2, 8
    in_features, out_features = 32, 32
    rank, alpha = 8, 32
    scaling = alpha / rank

    key = jax.random.PRNGKey(0)
    kx, kw, kb, ka = jax.random.split(key, 4)

    x = jax.random.normal(kx, (batch, seq, in_features), jnp.float32)
    w_base_pt = jax.random.normal(kw, (out_features, in_features), jnp.float32) * 0.02
    w_base = w_base_pt.T                                         # [in, out]
    b_base = jax.random.normal(kb, (out_features,), jnp.float32) * 0.02
    w_a = kaiming_uniform(ka, (rank, in_features)).T             # [in, rank]
    w_b = jnp.zeros((rank, out_features), jnp.float32)           # B init to zero

    out = lora_linear4bit_forward(x, w_base, b_base, w_a, w_b, scaling)
    out = jax.block_until_ready(out)

    xf = x.reshape(-1, in_features)
    ref = (xf @ w_base + b_base[None, :] + scaling * ((xf @ w_a) @ w_b)
           ).reshape(batch, seq, out_features)
    assert jnp.allclose(out, ref, atol=1e-5), "f32 mismatch vs reference"

    # ---- Test 2: bf16 operands, K-resident fast path ------------------------
    batch2, seq2 = 2, 64
    K2, N2, R2 = 256, 256, 8
    kx2, kw2, kb2, ka2, kbw2 = jax.random.split(jax.random.PRNGKey(1), 5)
    x_b = jax.random.normal(kx2, (batch2, seq2, K2), jnp.float32).astype(jnp.bfloat16)
    w_b2 = (jax.random.normal(kw2, (K2, N2), jnp.float32) * 0.02).astype(jnp.bfloat16)
    b_b2 = jax.random.normal(kb2, (N2,), jnp.float32) * 0.02
    a_b2 = (jax.random.normal(ka2, (K2, R2), jnp.float32) * 0.1).astype(jnp.bfloat16)
    bw_b2 = (jax.random.normal(kbw2, (R2, N2), jnp.float32) * 0.1).astype(jnp.bfloat16)

    out2 = lora_linear4bit_forward(x_b, w_b2, b_b2, a_b2, bw_b2, scaling)
    out2 = jax.block_until_ready(out2)

    x2f = x_b.astype(jnp.float32).reshape(-1, K2)
    ref2 = (x2f @ w_b2.astype(jnp.float32) + b_b2[None, :]
            + scaling * ((x2f @ a_b2.astype(jnp.float32)) @ bw_b2.astype(jnp.float32))
            ).reshape(batch2, seq2, N2)
    assert jnp.allclose(out2.astype(jnp.float32), ref2, rtol=5e-2, atol=5e-2), \
        "bf16 mismatch vs reference (K-resident path)"

    # ---- Test 3: force the K-tiled accumulator path (small VMEM budget) and
    #              exercise M padding (M = 100 -> tm = 112).
    batch3, seq3 = 2, 50
    K3, N3, R3 = 512, 512, 8
    kx3, kw3, kb3, ka3, kbw3 = jax.random.split(jax.random.PRNGKey(2), 5)
    x_c = jax.random.normal(kx3, (batch3, seq3, K3), jnp.float32).astype(jnp.bfloat16)
    w_c = (jax.random.normal(kw3, (K3, N3), jnp.float32) * 0.02).astype(jnp.bfloat16)
    b_c = jax.random.normal(kb3, (N3,), jnp.float32) * 0.02
    a_c = (jax.random.normal(ka3, (K3, R3), jnp.float32) * 0.1).astype(jnp.bfloat16)
    bw_c = (jax.random.normal(kbw3, (R3, N3), jnp.float32) * 0.1).astype(jnp.bfloat16)

    out3 = lora_linear4bit_forward(x_c, w_c, b_c, a_c, bw_c, scaling,
                                   vmem_budget_bytes=512 * 1024)
    out3 = jax.block_until_ready(out3)

    x3f = x_c.astype(jnp.float32).reshape(-1, K3)
    ref3 = (x3f @ w_c.astype(jnp.float32) + b_c[None, :]
            + scaling * ((x3f @ a_c.astype(jnp.float32)) @ bw_c.astype(jnp.float32))
            ).reshape(batch3, seq3, N3)
    assert jnp.allclose(out3.astype(jnp.float32), ref3, rtol=5e-2, atol=5e-2), \
        "bf16 mismatch vs reference (K-tiled path)"

    print("KERNEL_OK")
</pallas_src>

<mosaic_0001>
module attributes {stable_mosaic.version = 11 : i64} {
  func.func @_lora_kernel_k_resident(%arg0: i32, %arg1: i32, %arg2: memref<16x32xf32, #tpu.memory_space<vmem>>, %arg3: memref<32x32xf32, #tpu.memory_space<vmem>>, %arg4: memref<1x32xf32, #tpu.memory_space<vmem>>, %arg5: memref<16x8xf32, #tpu.memory_space<vmem>>, %arg6: memref<8x32xf32, #tpu.memory_space<vmem>>, %arg7: memref<16x32xf32, #tpu.memory_space<vmem>>) attributes {dimension_semantics = [#tpu.dimension_semantics<parallel>, #tpu.dimension_semantics<parallel>], iteration_bounds = array<i64: 1, 1>, scalar_prefetch = 0 : i64, scratch_operands = 0 : i64, tpu.core_type = #tpu.core_type<tc>, window_params = [{transform_indices = @transform_0, window_bounds = array<i64: 16, 32>}, {transform_indices = @transform_1, window_bounds = array<i64: 32, 32>}, {transform_indices = @transform_2, window_bounds = array<i64: 1, 32>}, {transform_indices = @transform_3, window_bounds = array<i64: 16, 8>}, {transform_indices = @transform_4, window_bounds = array<i64: 8, 32>}, {transform_indices = @transform_5, window_bounds = array<i64: 16, 32>}]} {
    %c0 = arith.constant 0 : index
    %c0_0 = arith.constant 0 : index
    %0 = vector.load %arg2[%c0, %c0_0] : memref<16x32xf32, #tpu.memory_space<vmem>>, vector<16x32xf32>
    %c0_1 = arith.constant 0 : index
    %c0_2 = arith.constant 0 : index
    %1 = vector.load %arg3[%c0_1, %c0_2] : memref<32x32xf32, #tpu.memory_space<vmem>>, vector<32x32xf32>
    %cst = arith.constant dense<0.000000e+00> : vector<16x32xf32>
    %2 = tpu.matmul %0, %1, %cst {dimension_numbers = #tpu.dot_dimension_numbers<[1], [0], [0], [1], [0, 0, 1, 1], [], []>} : vector<16x32xf32>, vector<32x32xf32>, vector<16x32xf32> -> vector<16x32xf32>
    %c0_3 = arith.constant 0 : index
    %c0_4 = arith.constant 0 : index
    %3 = vector.load %arg5[%c0_3, %c0_4] : memref<16x8xf32, #tpu.memory_space<vmem>>, vector<16x8xf32>
    %c0_5 = arith.constant 0 : index
    %c0_6 = arith.constant 0 : index
    %4 = vector.load %arg6[%c0_5, %c0_6] : memref<8x32xf32, #tpu.memory_space<vmem>>, vector<8x32xf32>
    %cst_7 = arith.constant dense<0.000000e+00> : vector<16x32xf32>
    %5 = tpu.matmul %3, %4, %cst_7 {dimension_numbers = #tpu.dot_dimension_numbers<[1], [0], [0], [1], [0, 0, 1, 1], [], []>} : vector<16x8xf32>, vector<8x32xf32>, vector<16x32xf32> -> vector<16x32xf32>
    %c0_8 = arith.constant 0 : index
    %c0_9 = arith.constant 0 : index
    %6 = vector.load %arg4[%c0_8, %c0_9] : memref<1x32xf32, #tpu.memory_space<vmem>>, vector<1x32xf32>
    %7 = vector.broadcast %6 : vector<1x32xf32> to vector<16x32xf32>
    %8 = arith.addf %2, %7 : vector<16x32xf32>
    %9 = arith.addf %8, %5 : vector<16x32xf32>
    %c0_10 = arith.constant 0 : index
    %c0_11 = arith.constant 0 : index
    %10 = vector.load %arg7[%c0_10, %c0_11] : memref<16x32xf32, #tpu.memory_space<vmem>>, vector<16x32xf32>
    tpu.vector_store %arg7[%c0_10, %c0_11], %9 {strides = array<i32>} : memref<16x32xf32, #tpu.memory_space<vmem>>, vector<16x32xf32>,
    return
  }
  func.func @transform_0(%arg0: i32, %arg1: i32) -> (i32, i32) {
    %c0_i32 = arith.constant 0 : i32
    %c0_i32_0 = arith.constant 0 : i32
    return %arg0, %c0_i32 : i32, i32
  }
  func.func @transform_1(%arg0: i32, %arg1: i32) -> (i32, i32) {
    %c0_i32 = arith.constant 0 : i32
    %c0_i32_0 = arith.constant 0 : i32
    return %c0_i32, %arg1 : i32, i32
  }
  func.func @transform_2(%arg0: i32, %arg1: i32) -> (i32, i32) {
    %c0_i32 = arith.constant 0 : i32
    %c0_i32_0 = arith.constant 0 : i32
    return %c0_i32, %arg1 : i32, i32
  }
  func.func @transform_3(%arg0: i32, %arg1: i32) -> (i32, i32) {
    %c0_i32 = arith.constant 0 : i32
    %c0_i32_0 = arith.constant 0 : i32
    return %arg0, %c0_i32 : i32, i32
  }
  func.func @transform_4(%arg0: i32, %arg1: i32) -> (i32, i32) {
    %c0_i32 = arith.constant 0 : i32
    %c0_i32_0 = arith.constant 0 : i32
    return %c0_i32, %arg1 : i32, i32
  }
  func.func @transform_5(%arg0: i32, %arg1: i32) -> (i32, i32) {
    %c0_i32 = arith.constant 0 : i32
    return %arg0, %arg1 : i32, i32
  }
}

</mosaic_0001>

<llo_original>
// kernel: tpu_custom_call.1
$region0: #{tpu_custom_call.1}
  #allocation0 [shape = 'u32[]', space=smem, size = 0x4, offset = 0x4, fixed_abs, tag = 'smem constant byte address 0x4 - core index']
  #allocation1 [shape = 'u32[144,128]{1,0:T(1,128)}', space=vmem, size = 0x12000, scoped, tag = 'internal scratch']
  %s0 = inlined_call_operand.vmem [shape: f32[16,32], index: 0, kind: input, shape index: {}]
  %s1 = inlined_call_operand.hbm [shape: f32[32,32], index: 1, kind: input, shape index: {}]
  %s2 = inlined_call_operand.vmem [shape: f32[1,32], index: 2, kind: input, shape index: {}]
  %s3 = inlined_call_operand.vmem [shape: f32[16,8], index: 3, kind: input, shape index: {}]
  %s4 = inlined_call_operand.vmem [shape: f32[8,32], index: 4, kind: input, shape index: {}]
  %s5 = inlined_call_operand.hbm [shape: f32[16,32], index: 5, kind: output, shape index: {}]
  %s6 = sld [smem:[#allocation0]]
  $region34: #{tpu_custom_call.1} parent=0
    _
  %s8 = ssub.s32 1, %s6
  %s9 = scalar_select 0, %s8, %s6
  $region1: #{tpu_custom_call.1} parent=0
    #allocation2 [shape = 'u8[16384]{0}', space=vmem, size = 0x4000, scoped, tag = 'input window, operand 1, single buffered']
    #allocation3 [shape = 's32[1]{0}', space=sflag, size = 0x4, scoped, tag = 'scoped memory for tpu_custom_call.1']
    #allocation4 [shape = 's32[1]{0}', space=sflag, size = 0x4, scoped, tag = 'scoped memory for tpu_custom_call.1']
    #allocation5 [shape = 'u8[8192]{0}', space=vmem, size = 0x2000, scoped, tag = 'output window, operand 0, single buffered']
    %10 = vsyncpa [#allocation3], 0
    %11 = vsyncpa [#allocation4], 0
    // Predicated region
    $region2: #{tpu_custom_call.1} parent=1 // pred_check
      _
    $region3: #{tpu_custom_call.1} parent=1 // pred_check_branch
      %13 = sbr.rel (0) target = $region5
    $region4: #{tpu_custom_call.1} parent=1 // pred_region
      _
    $region5: #{tpu_custom_call.1} parent=1 // pred_fallthru
      _
    // Predicated region
    $region6: #{tpu_custom_call.1} parent=1 // pred_check
      _
    $region7: #{tpu_custom_call.1} parent=1 // pred_check_branch
      %15 = sbr.rel (0) target = $region9
    $region8: #{tpu_custom_call.1} parent=1 // pred_region
      %s17 = ssub.s32 512, 512
      %18 = vsyncadd [#allocation3], %s17
      %s19 = sshll.u32 [#allocation2], 4
      %s20 = int_to_ptr.vmem [resolvable:$true] %s19
      %25 = dma.hbm_to_vmem [thread:$0]  %s1, 512, %s20, [#allocation3], 128, 128, 8
    $region9: #{tpu_custom_call.1} parent=1 // pred_fallthru
      _
    // Predicated region
    $region10: #{tpu_custom_call.1} parent=1 // pred_check
      _
    $region11: #{tpu_custom_call.1} parent=1 // pred_check_branch
      %27 = sbr.rel (0) target = $region13
    $region12: #{tpu_custom_call.1} parent=1 // pred_region
      _
    $region13: #{tpu_custom_call.1} parent=1 // pred_fallthru
      _
    // Predicated region
    $region14: #{tpu_custom_call.1} parent=1 // pred_check
      _
    $region15: #{tpu_custom_call.1} parent=1 // pred_check_branch
      %29 = sbr.rel (0) target = $region17
    $region16: #{tpu_custom_call.1} parent=1 // pred_region
      _
    $region17: #{tpu_custom_call.1} parent=1 // pred_fallthru
      _
    // Predicated region
    $region18: #{tpu_custom_call.1} parent=1 // pred_check
      _
    $region19: #{tpu_custom_call.1} parent=1 // pred_check_branch
      %31 = sbr.rel (0) target = $region21
    $region20: #{tpu_custom_call.1} parent=1 // pred_region
      _
    $region21: #{tpu_custom_call.1} parent=1 // pred_fallthru
      _
    // Predicated region
    $region22: #{tpu_custom_call.1} parent=1 // pred_check
      _
    $region23: #{tpu_custom_call.1} parent=1 // pred_check_branch
      %33 = sbr.rel (0) target = $region25
    $region24: #{tpu_custom_call.1} parent=1 // pred_region
      %34 = dma.done [#allocation3], 512
    $region25: #{tpu_custom_call.1} parent=1 // pred_fallthru
      _
    %v35 = vld [vmem:[%s0] sm:$0xff]
    %v36 = vld [vmem:[%s0 + $0x8] sm:$0xff]
    %v37 = vld [vmem:[#allocation2] sm:$0xff]
    %v38 = vld [vmem:[#allocation2 + $0x8] sm:$0xff]
    %v39 = vld [vmem:[#allocation2 + $0x10] sm:$0xff]
    %v40 = vld [vmem:[#allocation2 + $0x18] sm:$0xff]
    %v41 = vld [vmem:[%s3] sm:$0xff]
    %v42 = vld [vmem:[%s3 + $0x8] sm:$0xff]
    %v43 = vld [vmem:[%s4] sm:$0xff]
    %vm44 = vcmask 64512
    %v46 = vsel %vm44, %v41, 0
    %v49 = vsel %vm44, %v42, 0
    %51 = vmatprep.subr.mxu0 0.0
    %52 = vmatpush1.msra.mxu0 0.0
    %53 = vmatprep.subr.mxu0 0.0
    %54 = vmatpush1.msra.mxu0 0.0
    %55 = vmatprep.subr.mxu0 0.0
    %56 = vmatpush1.msra.mxu0 0.0
    %57 = vmatprep.subr.mxu0 0.0
    %58 = vmatpush1.msra.mxu0 0.0
    %59 = vmatprep.subr.mxu0 0.0
    %60 = vmatpush1.msra.mxu0 0.0
    %61 = vmatprep.subr.mxu0 0.0
    %62 = vmatpush1.msra.mxu0 0.0
    %63 = vmatprep.subr.mxu0 0.0
    %64 = vmatpush1.msra.mxu0 0.0
    %65 = vmatprep.subr.mxu0 0.0
    %66 = vmatpush1.msra.mxu0 0.0
    %67 = vmatprep.subr.mxu0 0.0
    %68 = vmatpush1.msra.mxu0 0.0
    %69 = vmatprep.subr.mxu0 0.0
    %70 = vmatpush1.msra.mxu0 0.0
    %71 = vmatprep.subr.mxu0 0.0
    %72 = vmatpush1.msra.mxu0 0.0
    %73 = vmatprep.subr.mxu0 0.0
    %74 = vmatpush1.msra.mxu0 0.0
    %75 = vmatprep.subr.mxu0 0.0
    %76 = vmatpush1.msra.mxu0 0.0
    %77 = vmatprep.subr.mxu0 0.0
    %78 = vmatpush1.msra.mxu0 0.0
    %79 = vmatprep.subr.mxu0 0.0
    %80 = vmatpush1.msra.mxu0 0.0
    %81 = vmatprep.subr.mxu0 0.0
    %82 = vmatpush1.msra.mxu0 %v43
    %83 = vmatprep.subr.mxu0 0.0
    %84 = vmatpush2.msra.mxu0 0.0
    %85 = vmatprep.subr.mxu0 0.0
    %86 = vmatpush2.msra.mxu0 0.0
    %87 = vmatprep.subr.mxu0 0.0
    %88 = vmatpush2.msra.mxu0 0.0
    %89 = vmatprep.subr.mxu0 0.0
    %90 = vmatpush2.msra.mxu0 0.0
    %91 = vmatprep.subr.mxu0 0.0
    %92 = vmatpush2.msra.mxu0 0.0
    %93 = vmatprep.subr.mxu0 0.0
    %94 = vmatpush2.msra.mxu0 0.0
    %95 = vmatprep.subr.mxu0 0.0
    %96 = vmatpush2.msra.mxu0 0.0
    %97 = vmatprep.subr.mxu0 0.0
    %98 = vmatpush2.msra.mxu0 0.0
    %99 = vmatprep.subr.mxu0 0.0
    %100 = vmatpush2.msra.mxu0 0.0
    %101 = vmatprep.subr.mxu0 0.0
    %102 = vmatpush2.msra.mxu0 0.0
    %103 = vmatprep.subr.mxu0 0.0
    %104 = vmatpush2.msra.mxu0 0.0
    %105 = vmatprep.subr.mxu0 0.0
    %106 = vmatpush2.msra.mxu0 0.0
    %107 = vmatprep.subr.mxu0 0.0
    %108 = vmatpush2.msra.mxu0 0.0
    %109 = vmatprep.subr.mxu0 0.0
    %110 = vmatpush2.msra.mxu0 0.0
    %111 = vmatprep.subr.mxu0 0.0
    %112 = vmatpush2.msra.mxu0 0.0
    %113 = vmatprep.subr.mxu0 0.0
    %114 = vmatpush2.msra.mxu0 0.0
    %115 = vmatprep.mubr.f32.mxu0 0.0
    %116 = vmatmul.mubr.f32.gmra.mxu0 %v46
    %v117 = vpop.f32.mrf.mxu0
    %v118 = vadd.f32 0.0, %v117
    %v119 = vpop.f32.mrf.mxu0
    %120 = vmatprep.mubr.f32.mxu0 0.0
    %121 = vmatmul.mubr.f32.gmra.mxu0 %v49
    %v122 = vpop.f32.mrf.mxu0
    %v123 = vadd.f32 0.0, %v122
    %v124 = vpop.f32.mrf.mxu0
    %125 = vdwg.mxu0
    %v126 = vld [vmem:[%s2] sm:$0x1]
    %v128 = vlaneseq
    %v129 = vshrl.u32 %v128, 7
    %v130 = vsub.s32 0, %v129
    %v131 = vrot.slane %v126, %v130
    %vm133 = vcmask 261120
    %v135 = vsel %vm133, %v35, 0
    %v138 = vsel %vm133, %v36, 0
    %140 = vmatprep.subr.mxu0 0.0
    %141 = vmatpush1.msra.mxu0 0.0
    %142 = vmatprep.subr.mxu0 0.0
    %143 = vmatpush1.msra.mxu0 0.0
    %144 = vmatprep.subr.mxu0 0.0
    %145 = vmatpush1.msra.mxu0 0.0
    %146 = vmatprep.subr.mxu0 0.0
    %147 = vmatpush1.msra.mxu0 0.0
    %148 = vmatprep.subr.mxu0 0.0
    %149 = vmatpush1.msra.mxu0 0.0
    %150 = vmatprep.subr.mxu0 0.0
    %151 = vmatpush1.msra.mxu0 0.0
    %152 = vmatprep.subr.mxu0 0.0
    %153 = vmatpush1.msra.mxu0 0.0
    %154 = vmatprep.subr.mxu0 0.0
    %155 = vmatpush1.msra.mxu0 0.0
    %156 = vmatprep.subr.mxu0 0.0
    %157 = vmatpush1.msra.mxu0 0.0
    %158 = vmatprep.subr.mxu0 0.0
    %159 = vmatpush1.msra.mxu0 0.0
    %160 = vmatprep.subr.mxu0 0.0
    %161 = vmatpush1.msra.mxu0 0.0
    %162 = vmatprep.subr.mxu0 0.0
    %163 = vmatpush1.msra.mxu0 0.0
    %164 = vmatprep.subr.mxu0 0.0
    %165 = vmatpush1.msra.mxu0 %v40
    %166 = vmatprep.subr.mxu0 0.0
    %167 = vmatpush1.msra.mxu0 %v39
    %168 = vmatprep.subr.mxu0 0.0
    %169 = vmatpush1.msra.mxu0 %v38
    %170 = vmatprep.subr.mxu0 0.0
    %171 = vmatpush1.msra.mxu0 %v37
    %172 = vmatprep.subr.mxu0 0.0
    %173 = vmatpush2.msra.mxu0 0.0
    %174 = vmatprep.subr.mxu0 0.0
    %175 = vmatpush2.msra.mxu0 0.0
    %176 = vmatprep.subr.mxu0 0.0
    %177 = vmatpush2.msra.mxu0 0.0
    %178 = vmatprep.subr.mxu0 0.0
    %179 = vmatpush2.msra.mxu0 0.0
    %180 = vmatprep.subr.mxu0 0.0
    %181 = vmatpush2.msra.mxu0 0.0
    %182 = vmatprep.subr.mxu0 0.0
    %183 = vmatpush2.msra.mxu0 0.0
    %184 = vmatprep.subr.mxu0 0.0
    %185 = vmatpush2.msra.mxu0 0.0
    %186 = vmatprep.subr.mxu0 0.0
    %187 = vmatpush2.msra.mxu0 0.0
    %188 = vmatprep.subr.mxu0 0.0
    %189 = vmatpush2.msra.mxu0 0.0
    %190 = vmatprep.subr.mxu0 0.0
    %191 = vmatpush2.msra.mxu0 0.0
    %192 = vmatprep.subr.mxu0 0.0
    %193 = vmatpush2.msra.mxu0 0.0
    %194 = vmatprep.subr.mxu0 0.0
    %195 = vmatpush2.msra.mxu0 0.0
    %196 = vmatprep.subr.mxu0 0.0
    %197 = vmatpush2.msra.mxu0 0.0
    %198 = vmatprep.subr.mxu0 0.0
    %199 = vmatpush2.msra.mxu0 0.0
    %200 = vmatprep.subr.mxu0 0.0
    %201 = vmatpush2.msra.mxu0 0.0
    %202 = vmatprep.subr.mxu0 0.0
    %203 = vmatpush2.msra.mxu0 0.0
    %204 = vmatprep.mubr.f32.mxu0 0.0
    %205 = vmatmul.mubr.f32.gmra.mxu0 %v135
    %v206 = vpop.f32.mrf.mxu0
    %v207 = vadd.f32 %v131, %v206
    %v208 = vpop.f32.mrf.mxu0
    %209 = vmatprep.mubr.f32.mxu0 0.0
    %210 = vmatmul.mubr.f32.gmra.mxu0 %v138
    %v211 = vpop.f32.mrf.mxu0
    %v212 = vadd.f32 %v131, %v211
    %v213 = vpop.f32.mrf.mxu0
    %214 = vdwg.mxu0
    %v215 = vadd.f32 %v207, %v118
    %v216 = vadd.f32 %v212, %v123
    %217 = vst.msk [vmem:[#allocation5] sm:$0xff] %vm133, %v215
    %218 = vst.msk [vmem:[#allocation5 + $0x8] sm:$0xff] %vm133, %v216
    // Predicated region
    $region26: #{tpu_custom_call.1} parent=1 // pred_check
      _
    $region27: #{tpu_custom_call.1} parent=1 // pred_check_branch
      %220 = sbr.rel (0) target = $region29
    $region28: #{tpu_custom_call.1} parent=1 // pred_region
      %s222 = ssub.s32 256, 256
      %223 = vsyncadd [#allocation4], %s222
      %s224 = sshll.u32 [#allocation5], 4
      %s225 = int_to_ptr.vmem [resolvable:$true] %s224
      %230 = dma.vmem_to_hbm [thread:$0]  %s225, 256, %s5, [#allocation4], 128, 128, 8
    $region29: #{tpu_custom_call.1} parent=1 // pred_fallthru
      _
    // Predicated region
    $region30: #{tpu_custom_call.1} parent=1 // pred_check
      _
    $region31: #{tpu_custom_call.1} parent=1 // pred_check_branch
      %232 = sbr.rel (0) target = $region33
    $region32: #{tpu_custom_call.1} parent=1 // pred_region
      %233 = dma.done [#allocation4], 256
    $region33: #{tpu_custom_call.1} parent=1 // pred_fallthru
      _
    %234 = vsyncpa [#allocation3], 1
    %235 = vsyncpa [#allocation4], 1

</llo_original>
